<compile_context>
chip_gen: v6e
topology: v6e:2x2x1
jax: 0.10.0
libtpu: 0.0.40
codegen_flags: <defaults>
</compile_context>

<pallas_src>
import functools
import math

import jax
import jax.numpy as jnp
import numpy as np
from jax import lax
from jax.experimental import pallas as pl
from jax.experimental.pallas import tpu as pltpu

_LANES = 128
_MAX_PACKED_WIDTH = 512            # cap on pack*C (keeps fold matrix / row width sane)
_PASS1_TARGET_BYTES = 1 << 20      # ~1 MiB reduction tiles
_PASS2_TARGET_BYTES = 2 << 20      # ~2 MiB streaming-apply tiles


def _round_up(x, m):
    return (x + m - 1) // m * m


def _sublane_multiple(dtype):
    """Native sublane packing for the dtype: 8 (f32), 16 (bf16), 32 (int8/fp8)."""
    itemsize = max(1, jnp.dtype(dtype).itemsize)
    return max(8, 8 * (4 // itemsize))


def _chip_config():
    """Per-generation tuning (scoped-VMEM budget, reduction chunk count).

    Falls back to v7x-safe values (64 MiB physical VMEM per TC, 2 TensorCores) when the
    generation cannot be determined.
    """
    vmem_limit = 32 * 1024 * 1024
    reduce_chunks = 2                      # v7x: split the reduction across both TCs
    try:
        kind = jax.devices()[0].device_kind.lower()
    except Exception:
        kind = ""
    if ("v5" in kind) or ("v6" in kind):   # v5e / v6e: single TC, 128 MiB physical VMEM
        vmem_limit = 64 * 1024 * 1024
        reduce_chunks = 1
    return vmem_limit, reduce_chunks


# ---------------------------------------------------------------------------
# Fused fast path: whole (rows, cp) packed feature block resident in VMEM.
# Reads feats from HBM exactly once (reduction + normalize + apply in one body).
# ---------------------------------------------------------------------------
def _grn_fused_body(x_ref, gamma_ref, beta_ref, o_ref, fold_ref):
    xf = x_ref[...].astype(jnp.float32)
    ss = jnp.sum(xf * xf, axis=0, keepdims=True)                    # (1, cp) per-lane SS
    if fold_ref is None:
        tot = ss                                                    # one channel per lane
    else:
        # fold[i, j] = 1 iff lane i and lane j hold the same channel.  One tiny MXU matmul
        # sums the `pack` channel groups AND re-broadcasts the total to every lane, with no
        # cross-lane relayout.
        tot = jnp.dot(ss, fold_ref[...],
                      preferred_element_type=jnp.float32,
                      precision=lax.Precision.HIGHEST)
    gx = jnp.sqrt(tot)                                              # (1, cp), channel-tiled
    # mean over the channel-tiled lanes == mean over the C channels
    nx = gx / (jnp.mean(gx, axis=-1, keepdims=True) + 1e-6)
    scale = gamma_ref[...] * nx + 1.0                               # gamma folded into scale
    o_ref[...] = (xf * scale + beta_ref[...]).astype(o_ref.dtype)


def _grn_fused_fold_kernel(x_ref, fold_ref, gamma_ref, beta_ref, o_ref):
    _grn_fused_body(x_ref, gamma_ref, beta_ref, o_ref, fold_ref)


def _grn_fused_nofold_kernel(x_ref, gamma_ref, beta_ref, o_ref):
    _grn_fused_body(x_ref, gamma_ref, beta_ref, o_ref, None)


# ---------------------------------------------------------------------------
# Two-pass path, pass 1: per-lane sum-of-squares partials.
# Grid = (chunk, tile); each chunk's (8, cp) partial block stays resident across the
# "arbitrary" tile axis and is accumulated with VPU-only adds.  The leading "parallel"
# chunk axis lets v7x spread the reduction over both TensorCores.  Chunks may be uneven:
# ghost steps are skipped with pl.when (the index_map clamps their block index into range),
# and the tail rows of the last (partial) tile are masked with an iota row mask.
# ---------------------------------------------------------------------------
def _grn_partial_ss_kernel(x_ref, part_ref, *, rows, tile_rows, inner, total_tiles):
    cc = pl.program_id(0)
    i = pl.program_id(1)

    @pl.when(i == 0)
    def _():
        part_ref[...] = jnp.zeros_like(part_ref)

    t = cc * inner + i                       # global tile index (may be a ghost step)

    @pl.when(t < total_tiles)
    def _():
        xf = x_ref[...].astype(jnp.float32)
        if rows % tile_rows != 0:
            # Mask out-of-range tail rows of the partial last tile before squaring
            # (edge-block reads beyond the array are unspecified).
            ridx = t * tile_rows + lax.broadcasted_iota(jnp.int32, xf.shape, 0)
            xf = jnp.where(ridx < rows, xf, 0.0)
        cp = xf.shape[-1]
        part_ref[...] += jnp.sum((xf * xf).reshape(tile_rows // 8, 8, cp), axis=0)


# ---------------------------------------------------------------------------
# Two-pass path, pass 2: out = x * scale + beta (gamma already folded into scale).
# Partial last output block: OOB writes are dropped, so no padding/slicing is needed.
# ---------------------------------------------------------------------------
def _grn_apply_kernel(x_ref, scale_ref, beta_ref, o_ref):
    xf = x_ref[...].astype(jnp.float32)
    o_ref[...] = (xf * scale_ref[...] + beta_ref[...]).astype(o_ref.dtype)


def minkowski_grn(feats, gamma, beta, *, tile_rows=None, force_two_pass=False):
    """GRN forward for sparse-tensor features. feats: (N, C), gamma/beta: (1, C)."""
    n, c = feats.shape
    out_dtype = feats.dtype
    itemsize = jnp.dtype(out_dtype).itemsize
    sub = _sublane_multiple(out_dtype)
    vmem_limit, cfg_chunks = _chip_config()

    # Lane-dense packing: (N, C) -> (N/pack, pack*C), cp = lcm(C, 128) a multiple of 128,
    # lane l <-> channel (l % c).  Awkward C keeps the natural layout (masked-store fallback).
    pack = _LANES // math.gcd(c, _LANES)
    if pack * c > _MAX_PACKED_WIDTH:
        pack = 1
    cp = pack * c

    rows = pl.cdiv(n, pack)
    n_pack = rows * pack
    if n_pack != n:
        # Pad only to a multiple of `pack` (< pack zero rows); zero rows do not change the
        # per-channel L2 norm.  Tile-granularity remainders are handled in-kernel instead.
        feats_p = jnp.pad(feats, ((0, n_pack - n), (0, 0)))
    else:
        feats_p = feats
    x_packed = feats_p.reshape(rows, cp)        # contiguous row-major reshape: no copy

    gamma_f = gamma.astype(jnp.float32).reshape(1, c)
    beta_f = beta.astype(jnp.float32).reshape(1, c)
    beta_t = jnp.tile(beta_f, (1, pack))        # (1, cp)

    # Fused single-read path: whole packed block + output + f32 temporaries must fit the
    # per-generation scoped-VMEM budget assuming default double-buffering (~6x the block).
    fused_bytes_est = 6 * rows * cp * 4
    use_fused = (not force_two_pass) and (fused_bytes_est <= vmem_limit)

    if use_fused:
        gamma_t = jnp.tile(gamma_f, (1, pack))
        x_spec = pl.BlockSpec((rows, cp), lambda i: (0, 0))
        par_spec = pl.BlockSpec((1, cp), lambda i: (0, 0))
        if pack > 1:
            ch = jnp.arange(cp, dtype=jnp.int32) % c
            fold = (ch[:, None] == ch[None, :]).astype(jnp.float32)     # (cp, cp)
            kernel = _grn_fused_fold_kernel
            operands = (x_packed, fold, gamma_t, beta_t)
            in_specs = [x_spec, pl.BlockSpec((cp, cp), lambda i: (0, 0)),
                        par_spec, par_spec]
        else:
            kernel = _grn_fused_nofold_kernel
            operands = (x_packed, gamma_t, beta_t)
            in_specs = [x_spec, par_spec, par_spec]

        out_packed = pl.pallas_call(
            kernel,
            out_shape=jax.ShapeDtypeStruct((rows, cp), out_dtype),
            grid_spec=pltpu.PrefetchScalarGridSpec(
                num_scalar_prefetch=0,
                grid=(1,),
                in_specs=in_specs,
                out_specs=pl.BlockSpec((rows, cp), lambda i: (0, 0)),
            ),
            compiler_params=pltpu.CompilerParams(
                dimension_semantics=("arbitrary",),
                vmem_limit_bytes=vmem_limit),
        )(*operands)
    else:
        # ------------------------- two-pass path -------------------------
        def _tile_from_bytes(target_bytes):
            t = max(sub, (target_bytes // (cp * itemsize)) // sub * sub)
            if tile_rows is not None:
                t = min(t, max(sub, _round_up(tile_rows, sub)))
            return t

        tile1 = _tile_from_bytes(_PASS1_TARGET_BYTES)      # reduction tiles
        tile2 = _tile_from_bytes(_PASS2_TARGET_BYTES)      # streaming-apply tiles (decoupled)
        if rows >= 2 * sub:
            # keep >= 2 apply steps so the "parallel" grid can feed both v7x TensorCores
            tile2 = max(sub, min(tile2, _round_up(pl.cdiv(rows, 2), sub)))

        total_tiles = pl.cdiv(rows, tile1)
        chunks = max(1, min(cfg_chunks, total_tiles))
        inner = pl.cdiv(total_tiles, chunks)

        partial_kernel = functools.partial(
            _grn_partial_ss_kernel,
            rows=rows, tile_rows=tile1, inner=inner, total_tiles=total_tiles)

        partials = pl.pallas_call(
            partial_kernel,
            out_shape=jax.ShapeDtypeStruct((chunks * 8, cp), jnp.float32),
            grid_spec=pltpu.PrefetchScalarGridSpec(
                num_scalar_prefetch=0,
                grid=(chunks, inner),
                in_specs=[
                    pl.BlockSpec(
                        (tile1, cp),
                        lambda cc, i: (jnp.minimum(cc * inner + i, total_tiles - 1), 0)),
                ],
                out_specs=pl.BlockSpec((8, cp), lambda cc, i: (cc, 0)),
            ),
            compiler_params=pltpu.CompilerParams(
                dimension_semantics=("parallel", "arbitrary"),
                vmem_limit_bytes=vmem_limit),
        )(x_packed)

        # Tiny (1, C) finalize on the host (epsilon placement identical to PyTorch).
        ss = jnp.sum(partials, axis=0)                                   # (cp,)
        chan_ss = jnp.sum(ss.reshape(pack, c), axis=0)                   # (c,)
        gx = jnp.sqrt(chan_ss)[None, :]                                  # (1, c)
        nx = gx / (jnp.mean(gx, axis=-1, keepdims=True) + 1e-6)
        scale_t = jnp.tile(gamma_f * nx + 1.0, (1, pack))                # (1, cp)

        grid_rows = pl.cdiv(rows, tile2)
        out_packed = pl.pallas_call(
            _grn_apply_kernel,
            out_shape=jax.ShapeDtypeStruct((rows, cp), out_dtype),
            grid_spec=pltpu.PrefetchScalarGridSpec(
                num_scalar_prefetch=0,
                grid=(grid_rows,),
                in_specs=[
                    pl.BlockSpec((tile2, cp), lambda i: (i, 0)),
                    pl.BlockSpec((1, cp), lambda i: (0, 0)),
                    pl.BlockSpec((1, cp), lambda i: (0, 0)),
                ],
                out_specs=pl.BlockSpec((tile2, cp), lambda i: (i, 0)),
            ),
            compiler_params=pltpu.CompilerParams(
                dimension_semantics=("parallel",),
                vmem_limit_bytes=vmem_limit),
        )(x_packed, scale_t, beta_t)

    out = out_packed.reshape(n_pack, c)
    return out[:n] if n_pack != n else out


def grn_reference(feats, gamma, beta):
    gx = jnp.linalg.norm(feats, ord=2, axis=0, keepdims=True)
    nx = gx / (jnp.mean(gx, axis=-1, keepdims=True) + 1e-6)
    return gamma * (feats * nx) + beta + feats


if __name__ == "__main__":
    key = jax.random.PRNGKey(0)
    k_x, k_g, k_b, k_x2, k_x3 = jax.random.split(key, 5)

    N, C = 128, 32  # N sparse points, C = dim
    feats = jax.random.normal(k_x, (N, C), dtype=jnp.float32)

    # Module __init__ sets gamma/beta to zeros(1, dim); small random values here so the
    # gamma/beta path is actually exercised.
    gamma = 0.1 * jax.random.normal(k_g, (1, C), dtype=jnp.float32)
    beta = 0.1 * jax.random.normal(k_b, (1, C), dtype=jnp.float32)

    # Fast path: fused single-kernel GRN (feats fit in VMEM).
    out = jax.block_until_ready(minkowski_grn(feats, gamma, beta))
    ref = grn_reference(feats, gamma, beta)
    np.testing.assert_allclose(np.asarray(out), np.asarray(ref), rtol=1e-5, atol=1e-5)

    # Two-pass path: small tiles, row count not tile-aligned (partial edge blocks in both
    # passes + in-kernel tail mask, chunked reduction, lane packing).
    N2 = 1000
    feats2 = jax.random.normal(k_x2, (N2, C), dtype=jnp.float32)
    out2 = jax.block_until_ready(
        minkowski_grn(feats2, gamma, beta, tile_rows=64, force_two_pass=True))
    ref2 = grn_reference(feats2, gamma, beta)
    np.testing.assert_allclose(np.asarray(out2), np.asarray(ref2), rtol=1e-5, atol=1e-5)

    # Two-pass path with N not a multiple of the lane pack (tiny pack-pad) and an odd tile
    # count (exercises the uneven-chunk / ghost-step handling of the reduction grid).
    N3 = 999
    feats3 = jax.random.normal(k_x3, (N3, C), dtype=jnp.float32)
    out3 = jax.block_until_ready(
        minkowski_grn(feats3, gamma, beta, tile_rows=96, force_two_pass=True))
    ref3 = grn_reference(feats3, gamma, beta)
    np.testing.assert_allclose(np.asarray(out3), np.asarray(ref3), rtol=1e-5, atol=1e-5)

    print("KERNEL_OK")
</pallas_src>

<mosaic_0001>
module attributes {stable_mosaic.version = 11 : i64} {
  func.func @_grn_fused_fold_kernel(%arg0: i32, %arg1: memref<32x128xf32, #tpu.memory_space<vmem>>, %arg2: memref<128x128xf32, #tpu.memory_space<vmem>>, %arg3: memref<1x128xf32, #tpu.memory_space<vmem>>, %arg4: memref<1x128xf32, #tpu.memory_space<vmem>>, %arg5: memref<32x128xf32, #tpu.memory_space<vmem>>) attributes {dimension_semantics = [#tpu.dimension_semantics<arbitrary>], iteration_bounds = array<i64: 1>, scalar_prefetch = 0 : i64, scratch_operands = 0 : i64, tpu.core_type = #tpu.core_type<tc>, window_params = [{pipeline_mode = #tpu.pipeline_mode<synchronous>, transform_indices = @transform_0, window_bounds = array<i64: 32, 128>}, {pipeline_mode = #tpu.pipeline_mode<synchronous>, transform_indices = @transform_1, window_bounds = array<i64: 128, 128>}, {pipeline_mode = #tpu.pipeline_mode<synchronous>, transform_indices = @transform_2, window_bounds = array<i64: 1, 128>}, {pipeline_mode = #tpu.pipeline_mode<synchronous>, transform_indices = @transform_3, window_bounds = array<i64: 1, 128>}, {pipeline_mode = #tpu.pipeline_mode<synchronous>, transform_indices = @transform_4, window_bounds = array<i64: 32, 128>}]} {
    %c0 = arith.constant 0 : index
    %c0_0 = arith.constant 0 : index
    %0 = vector.load %arg1[%c0, %c0_0] : memref<32x128xf32, #tpu.memory_space<vmem>>, vector<32x128xf32>
    %1 = arith.mulf %0, %0 : vector<32x128xf32>
    %cst = arith.constant dense<0.000000e+00> : vector<128xf32>
    %2 = vector.multi_reduction <add>, %1, %cst [0] : vector<32x128xf32> to vector<128xf32>
    %3 = vector.shape_cast %2 : vector<128xf32> to vector<1x128xf32>
    %c0_1 = arith.constant 0 : index
    %c0_2 = arith.constant 0 : index
    %4 = vector.load %arg2[%c0_1, %c0_2] : memref<128x128xf32, #tpu.memory_space<vmem>>, vector<128x128xf32>
    %cst_3 = arith.constant dense<0.000000e+00> : vector<1x128xf32>
    %5 = tpu.matmul %3, %4, %cst_3 {dimension_numbers = #tpu.dot_dimension_numbers<[1], [0], [0], [1], [0, 0, 1, 1], [], []>, precision = #tpu.contract_precision<fp32>} : vector<1x128xf32>, vector<128x128xf32>, vector<1x128xf32> -> vector<1x128xf32>
    %6 = math.sqrt %5 : vector<1x128xf32>
    %cst_4 = arith.constant dense<0.000000e+00> : vector<1xf32>
    %7 = vector.multi_reduction <add>, %6, %cst_4 [1] : vector<1x128xf32> to vector<1xf32>
    %8 = vector.shape_cast %7 : vector<1xf32> to vector<1x1xf32>
    %cst_5 = arith.constant 1.280000e+02 : f32
    %9 = vector.broadcast %cst_5 : f32 to vector<1x1xf32>
    %10 = arith.divf %8, %9 : vector<1x1xf32>
    %cst_6 = arith.constant 9.99999997E-7 : f32
    %11 = vector.broadcast %cst_6 : f32 to vector<1x1xf32>
    %12 = arith.addf %10, %11 : vector<1x1xf32>
    %13 = vector.broadcast %12 : vector<1x1xf32> to vector<1x128xf32>
    %14 = arith.divf %6, %13 : vector<1x128xf32>
    %c0_7 = arith.constant 0 : index
    %c0_8 = arith.constant 0 : index
    %15 = vector.load %arg3[%c0_7, %c0_8] : memref<1x128xf32, #tpu.memory_space<vmem>>, vector<1x128xf32>
    %16 = arith.mulf %15, %14 : vector<1x128xf32>
    %cst_9 = arith.constant 1.000000e+00 : f32
    %17 = vector.broadcast %cst_9 : f32 to vector<1x128xf32>
    %18 = arith.addf %16, %17 : vector<1x128xf32>
    %19 = vector.broadcast %18 : vector<1x128xf32> to vector<32x128xf32>
    %20 = arith.mulf %0, %19 : vector<32x128xf32>
    %c0_10 = arith.constant 0 : index
    %c0_11 = arith.constant 0 : index
    %21 = vector.load %arg4[%c0_10, %c0_11] : memref<1x128xf32, #tpu.memory_space<vmem>>, vector<1x128xf32>
    %22 = vector.broadcast %21 : vector<1x128xf32> to vector<32x128xf32>
    %23 = arith.addf %20, %22 : vector<32x128xf32>
    %c0_12 = arith.constant 0 : index
    %c0_13 = arith.constant 0 : index
    %24 = vector.load %arg5[%c0_12, %c0_13] : memref<32x128xf32, #tpu.memory_space<vmem>>, vector<32x128xf32>
    tpu.vector_store %arg5[%c0_12, %c0_13], %23 {strides = array<i32>} : memref<32x128xf32, #tpu.memory_space<vmem>>, vector<32x128xf32>,
    return
  }
  func.func @transform_0(%arg0: i32) -> (i32, i32) {
    %c0_i32 = arith.constant 0 : i32
    %c0_i32_0 = arith.constant 0 : i32
    %c0_i32_1 = arith.constant 0 : i32
    return %c0_i32, %c0_i32_0 : i32, i32
  }
  func.func @transform_1(%arg0: i32) -> (i32, i32) {
    %c0_i32 = arith.constant 0 : i32
    %c0_i32_0 = arith.constant 0 : i32
    %c0_i32_1 = arith.constant 0 : i32
    return %c0_i32, %c0_i32_0 : i32, i32
  }
  func.func @transform_2(%arg0: i32) -> (i32, i32) {
    %c0_i32 = arith.constant 0 : i32
    %c0_i32_0 = arith.constant 0 : i32
    %c0_i32_1 = arith.constant 0 : i32
    return %c0_i32, %c0_i32_0 : i32, i32
  }
  func.func @transform_3(%arg0: i32) -> (i32, i32) {
    %c0_i32 = arith.constant 0 : i32
    %c0_i32_0 = arith.constant 0 : i32
    %c0_i32_1 = arith.constant 0 : i32
    return %c0_i32, %c0_i32_0 : i32, i32
  }
  func.func @transform_4(%arg0: i32) -> (i32, i32) {
    %c0_i32 = arith.constant 0 : i32
    %c0_i32_0 = arith.constant 0 : i32
    %c0_i32_1 = arith.constant 0 : i32
    return %c0_i32, %c0_i32_0 : i32, i32
  }
}

</mosaic_0001>

<llo_original>
// kernel: tpu_custom_call.1
$region0: #{tpu_custom_call.1}
  #allocation0 [shape = 'u32[]', space=smem, size = 0x4, offset = 0x4, fixed_abs, tag = 'smem constant byte address 0x4 - core index']
  #allocation1 [shape = 'u32[144,128]{1,0:T(1,128)}', space=vmem, size = 0x12000, scoped, tag = 'internal scratch']
  %s0 = inlined_call_operand.hbm [shape: f32[32,128], index: 0, kind: input, shape index: {}]
  %s1 = inlined_call_operand.hbm [shape: f32[128,128], index: 1, kind: input, shape index: {}]
  %s2 = inlined_call_operand.vmem [shape: f32[1,128], index: 2, kind: input, shape index: {}]
  %s3 = inlined_call_operand.vmem [shape: f32[1,128], index: 3, kind: input, shape index: {}]
  %s4 = inlined_call_operand.hbm [shape: f32[32,128], index: 4, kind: output, shape index: {}]
  %s5 = sld [smem:[#allocation0]]
  $region34: #{tpu_custom_call.1} parent=0
    _
  %s7 = ssub.s32 1, %s5
  %s8 = scalar_select 0, %s7, %s5
  $region1: #{tpu_custom_call.1} parent=0
    #allocation2 [shape = 'u8[16384]{0}', space=vmem, size = 0x4000, scoped, tag = 'input window, operand 0, single buffered']
    #allocation3 [shape = 's32[1]{0}', space=sflag, size = 0x4, scoped, tag = 'scoped memory for tpu_custom_call.1']
    #allocation4 [shape = 's32[1]{0}', space=sflag, size = 0x4, scoped, tag = 'scoped memory for tpu_custom_call.1']
    #allocation5 [shape = 'u8[65536]{0}', space=vmem, size = 0x10000, scoped, tag = 'input window, operand 1, single buffered']
    #allocation6 [shape = 's32[1]{0}', space=sflag, size = 0x4, scoped, tag = 'scoped memory for tpu_custom_call.1']
    #allocation7 [shape = 'u8[16384]{0}', space=vmem, size = 0x4000, scoped, tag = 'output window, operand 0, single buffered']
    %9 = vsyncpa [#allocation3], 0
    %10 = vsyncpa [#allocation6], 0
    %11 = vsyncpa [#allocation4], 0
    // Predicated region
    $region2: #{tpu_custom_call.1} parent=1 // pred_check
      _
    $region3: #{tpu_custom_call.1} parent=1 // pred_check_branch
      %13 = sbr.rel (0) target = $region5
    $region4: #{tpu_custom_call.1} parent=1 // pred_region
      %s15 = ssub.s32 512, 512
      %16 = vsyncadd [#allocation3], %s15
      %s17 = sshll.u32 [#allocation2], 4
      %s18 = int_to_ptr.vmem [resolvable:$true] %s17
      %23 = dma.hbm_to_vmem [thread:$0]  %s0, 512, %s18, [#allocation3], 128, 128, 8
    $region5: #{tpu_custom_call.1} parent=1 // pred_fallthru
      _
    // Predicated region
    $region6: #{tpu_custom_call.1} parent=1 // pred_check
      _
    $region7: #{tpu_custom_call.1} parent=1 // pred_check_branch
      %25 = sbr.rel (0) target = $region9
    $region8: #{tpu_custom_call.1} parent=1 // pred_region
      %s27 = ssub.s32 2048, 2048
      %28 = vsyncadd [#allocation6], %s27
      %s29 = sshll.u32 [#allocation5], 4
      %s30 = int_to_ptr.vmem [resolvable:$true] %s29
      %35 = dma.hbm_to_vmem [thread:$0]  %s1, 2048, %s30, [#allocation6], 128, 128, 8
    $region9: #{tpu_custom_call.1} parent=1 // pred_fallthru
      _
    // Predicated region
    $region10: #{tpu_custom_call.1} parent=1 // pred_check
      _
    $region11: #{tpu_custom_call.1} parent=1 // pred_check_branch
      %37 = sbr.rel (0) target = $region13
    $region12: #{tpu_custom_call.1} parent=1 // pred_region
      _
    $region13: #{tpu_custom_call.1} parent=1 // pred_fallthru
      _
    // Predicated region
    $region14: #{tpu_custom_call.1} parent=1 // pred_check
      _
    $region15: #{tpu_custom_call.1} parent=1 // pred_check_branch
      %39 = sbr.rel (0) target = $region17
    $region16: #{tpu_custom_call.1} parent=1 // pred_region
      _
    $region17: #{tpu_custom_call.1} parent=1 // pred_fallthru
      _
    // Predicated region
    $region18: #{tpu_custom_call.1} parent=1 // pred_check
      _
    $region19: #{tpu_custom_call.1} parent=1 // pred_check_branch
      %41 = sbr.rel (0) target = $region21
    $region20: #{tpu_custom_call.1} parent=1 // pred_region
      %42 = dma.done [#allocation3], 512
    $region21: #{tpu_custom_call.1} parent=1 // pred_fallthru
      _
    // Predicated region
    $region22: #{tpu_custom_call.1} parent=1 // pred_check
      _
    $region23: #{tpu_custom_call.1} parent=1 // pred_check_branch
      %44 = sbr.rel (0) target = $region25
    $region24: #{tpu_custom_call.1} parent=1 // pred_region
      %45 = dma.done [#allocation6], 2048
    $region25: #{tpu_custom_call.1} parent=1 // pred_fallthru
      _
    %v46 = vld [vmem:[#allocation2] sm:$0xff]
    %v47 = vld [vmem:[#allocation2 + $0x8] sm:$0xff]
    %v48 = vld [vmem:[#allocation2 + $0x10] sm:$0xff]
    %v49 = vld [vmem:[#allocation2 + $0x18] sm:$0xff]
    %v50 = vmul.f32 %v46, %v46
    %v51 = vmul.f32 %v47, %v47
    %v52 = vmul.f32 %v48, %v48
    %v53 = vmul.f32 %v49, %v49
    %v54 = vadd.f32 %v50, %v51
    %v55 = vadd.f32 %v54, %v52
    %v56 = vadd.f32 %v55, %v53
    %v57 = vrot.slane %v56, 4
    %v58 = vadd.f32 %v56, %v57
    %v59 = vrot.slane %v58, 2
    %v60 = vadd.f32 %v58, %v59
    %v61 = vrot.slane %v60, 1
    %v62 = vadd.f32 %v60, %v61
    %v63 = vld [vmem:[#allocation5] sm:$0xff]
    %v64 = vld [vmem:[#allocation5 + $0x8] sm:$0xff]
    %v65 = vld [vmem:[#allocation5 + $0x10] sm:$0xff]
    %v66 = vld [vmem:[#allocation5 + $0x18] sm:$0xff]
    %v67 = vld [vmem:[#allocation5 + $0x20] sm:$0xff]
    %v68 = vld [vmem:[#allocation5 + $0x28] sm:$0xff]
    %v69 = vld [vmem:[#allocation5 + $0x30] sm:$0xff]
    %v70 = vld [vmem:[#allocation5 + $0x38] sm:$0xff]
    %v71 = vld [vmem:[#allocation5 + $0x40] sm:$0xff]
    %v72 = vld [vmem:[#allocation5 + $0x48] sm:$0xff]
    %v73 = vld [vmem:[#allocation5 + $0x50] sm:$0xff]
    %v74 = vld [vmem:[#allocation5 + $0x58] sm:$0xff]
    %v75 = vld [vmem:[#allocation5 + $0x60] sm:$0xff]
    %v76 = vld [vmem:[#allocation5 + $0x68] sm:$0xff]
    %v77 = vld [vmem:[#allocation5 + $0x70] sm:$0xff]
    %v78 = vld [vmem:[#allocation5 + $0x78] sm:$0xff]
    %79 = vmatprep.subr.mxu0 0.0
    %v80 = vand.u32 %v78, 4294901760
    %81 = vmatpush1.msra.mxu0 %v80
    %82 = vmatprep.subr.mxu0 0.0
    %v83 = vand.u32 %v77, 4294901760
    %84 = vmatpush1.msra.mxu0 %v83
    %85 = vmatprep.subr.mxu0 0.0
    %v86 = vand.u32 %v76, 4294901760
    %87 = vmatpush1.msra.mxu0 %v86
    %88 = vmatprep.subr.mxu0 0.0
    %v89 = vand.u32 %v75, 4294901760
    %90 = vmatpush1.msra.mxu0 %v89
    %91 = vmatprep.subr.mxu0 0.0
    %v92 = vand.u32 %v74, 4294901760
    %93 = vmatpush1.msra.mxu0 %v92
    %94 = vmatprep.subr.mxu0 0.0
    %v95 = vand.u32 %v73, 4294901760
    %96 = vmatpush1.msra.mxu0 %v95
    %97 = vmatprep.subr.mxu0 0.0
    %v98 = vand.u32 %v72, 4294901760
    %99 = vmatpush1.msra.mxu0 %v98
    %100 = vmatprep.subr.mxu0 0.0
    %v101 = vand.u32 %v71, 4294901760
    %102 = vmatpush1.msra.mxu0 %v101
    %103 = vmatprep.subr.mxu0 0.0
    %v104 = vand.u32 %v70, 4294901760
    %105 = vmatpush1.msra.mxu0 %v104
    %106 = vmatprep.subr.mxu0 0.0
    %v107 = vand.u32 %v69, 4294901760
    %108 = vmatpush1.msra.mxu0 %v107
    %109 = vmatprep.subr.mxu0 0.0
    %v110 = vand.u32 %v68, 4294901760
    %111 = vmatpush1.msra.mxu0 %v110
    %112 = vmatprep.subr.mxu0 0.0
    %v113 = vand.u32 %v67, 4294901760
    %114 = vmatpush1.msra.mxu0 %v113
    %115 = vmatprep.subr.mxu0 0.0
    %v116 = vand.u32 %v66, 4294901760
    %117 = vmatpush1.msra.mxu0 %v116
    %118 = vmatprep.subr.mxu0 0.0
    %v119 = vand.u32 %v65, 4294901760
    %120 = vmatpush1.msra.mxu0 %v119
    %121 = vmatprep.subr.mxu0 0.0
    %v122 = vand.u32 %v64, 4294901760
    %123 = vmatpush1.msra.mxu0 %v122
    %124 = vmatprep.subr.mxu0 0.0
    %v125 = vand.u32 %v63, 4294901760
    %126 = vmatpush1.msra.mxu0 %v125
    %127 = vmatprep.subr.mxu0 0.0
    %128 = vmatpush2.msra.mxu0 0.0
    %129 = vmatprep.subr.mxu0 0.0
    %130 = vmatpush2.msra.mxu0 0.0
    %131 = vmatprep.subr.mxu0 0.0
    %132 = vmatpush2.msra.mxu0 0.0
    %133 = vmatprep.subr.mxu0 0.0
    %134 = vmatpush2.msra.mxu0 0.0
    %135 = vmatprep.subr.mxu0 0.0
    %136 = vmatpush2.msra.mxu0 0.0
    %137 = vmatprep.subr.mxu0 0.0
    %138 = vmatpush2.msra.mxu0 0.0
    %139 = vmatprep.subr.mxu0 0.0
    %140 = vmatpush2.msra.mxu0 0.0
    %141 = vmatprep.subr.mxu0 0.0
    %142 = vmatpush2.msra.mxu0 0.0
    %143 = vmatprep.subr.mxu0 0.0
    %144 = vmatpush2.msra.mxu0 0.0
    %145 = vmatprep.subr.mxu0 0.0
    %146 = vmatpush2.msra.mxu0 0.0
    %147 = vmatprep.subr.mxu0 0.0
    %148 = vmatpush2.msra.mxu0 0.0
    %149 = vmatprep.subr.mxu0 0.0
    %150 = vmatpush2.msra.mxu0 0.0
    %151 = vmatprep.subr.mxu0 0.0
    %152 = vmatpush2.msra.mxu0 0.0
    %153 = vmatprep.subr.mxu0 0.0
    %154 = vmatpush2.msra.mxu0 0.0
    %155 = vmatprep.subr.mxu0 0.0
    %156 = vmatpush2.msra.mxu0 0.0
    %157 = vmatprep.subr.mxu0 0.0
    %158 = vmatpush2.msra.mxu0 0.0
    %159 = vmatprep.mubr.f32.mxu0 0.0
    %v160 = vand.u32 %v62, 4294901760
    %v161 = vsub.f32 %v62, %v160
    %v162 = vand.u32 %v161, 4294901760
    %v163 = vsub.f32 %v161, %v162
    %v164 = vand.u32 %v163, 4294901760
    %165 = vmatmul.mubr.f32.gmra.mxu0 %v164
    %v166 = vpop.f32.mrf.mxu0
    %v167 = vadd.f32 0.0, %v166
    %v168 = vpop.f32.mrf.mxu0
    %169 = vdwg.mxu0
    %170 = vmatprep.subr.mxu0 0.0
    %v171 = vand.u32 %v78, 4294901760
    %v172 = vsub.f32 %v78, %v171
    %v173 = vand.u32 %v172, 4294901760
    %v174 = vsub.f32 %v172, %v173
    %v175 = vand.u32 %v174, 4294901760
    %176 = vmatpush1.msra.mxu0 %v175
    %177 = vmatprep.subr.mxu0 0.0
    %v178 = vand.u32 %v77, 4294901760
    %v179 = vsub.f32 %v77, %v178
    %v180 = vand.u32 %v179, 4294901760
    %v181 = vsub.f32 %v179, %v180
    %v182 = vand.u32 %v181, 4294901760
    %183 = vmatpush1.msra.mxu0 %v182
    %184 = vmatprep.subr.mxu0 0.0
    %v185 = vand.u32 %v76, 4294901760
    %v186 = vsub.f32 %v76, %v185
    %v187 = vand.u32 %v186, 4294901760
    %v188 = vsub.f32 %v186, %v187
    %v189 = vand.u32 %v188, 4294901760
    %190 = vmatpush1.msra.mxu0 %v189
    %191 = vmatprep.subr.mxu0 0.0
    %v192 = vand.u32 %v75, 4294901760
    %v193 = vsub.f32 %v75, %v192
    %v194 = vand.u32 %v193, 4294901760
    %v195 = vsub.f32 %v193, %v194
    %v196 = vand.u32 %v195, 4294901760
    %197 = vmatpush1.msra.mxu0 %v196
    %198 = vmatprep.subr.mxu0 0.0
    %v199 = vand.u32 %v74, 4294901760
    %v200 = vsub.f32 %v74, %v199
    %v201 = vand.u32 %v200, 4294901760
    %v202 = vsub.f32 %v200, %v201
    %v203 = vand.u32 %v202, 4294901760
    %204 = vmatpush1.msra.mxu0 %v203
    %205 = vmatprep.subr.mxu0 0.0
    %v206 = vand.u32 %v73, 4294901760
    %v207 = vsub.f32 %v73, %v206
    %v208 = vand.u32 %v207, 4294901760
    %v209 = vsub.f32 %v207, %v208
    %v210 = vand.u32 %v209, 4294901760
    %211 = vmatpush1.msra.mxu0 %v210
    %212 = vmatprep.subr.mxu0 0.0
    %v213 = vand.u32 %v72, 4294901760
    %v214 = vsub.f32 %v72, %v213
    %v215 = vand.u32 %v214, 4294901760
    %v216 = vsub.f32 %v214, %v215
    %v217 = vand.u32 %v216, 4294901760
    %218 = vmatpush1.msra.mxu0 %v217
    %219 = vmatprep.subr.mxu0 0.0
    %v220 = vand.u32 %v71, 4294901760
    %v221 = vsub.f32 %v71, %v220
    %v222 = vand.u32 %v221, 4294901760
    %v223 = vsub.f32 %v221, %v222
    %v224 = vand.u32 %v223, 4294901760
    %225 = vmatpush1.msra.mxu0 %v224
    %226 = vmatprep.subr.mxu0 0.0
    %v227 = vand.u32 %v70, 4294901760
    %v228 = vsub.f32 %v70, %v227
    %v229 = vand.u32 %v228, 4294901760
    %v230 = vsub.f32 %v228, %v229
    %v231 = vand.u32 %v230, 4294901760
    %232 = vmatpush1.msra.mxu0 %v231
    %233 = vmatprep.subr.mxu0 0.0
    %v234 = vand.u32 %v69, 4294901760
    %v235 = vsub.f32 %v69, %v234
    %v236 = vand.u32 %v235, 4294901760
    %v237 = vsub.f32 %v235, %v236
    %v238 = vand.u32 %v237, 4294901760
    %239 = vmatpush1.msra.mxu0 %v238
    %240 = vmatprep.subr.mxu0 0.0
    %v241 = vand.u32 %v68, 4294901760
    %v242 = vsub.f32 %v68, %v241
    %v243 = vand.u32 %v242, 4294901760
    %v244 = vsub.f32 %v242, %v243
    %v245 = vand.u32 %v244, 4294901760
    %246 = vmatpush1.msra.mxu0 %v245
    %247 = vmatprep.subr.mxu0 0.0
    %v248 = vand.u32 %v67, 4294901760
    %v249 = vsub.f32 %v67, %v248
    %v250 = vand.u32 %v249, 4294901760
    %v251 = vsub.f32 %v249, %v250
    %v252 = vand.u32 %v251, 4294901760
    %253 = vmatpush1.msra.mxu0 %v252
    %254 = vmatprep.subr.mxu0 0.0
    %v255 = vand.u32 %v66, 4294901760
    %v256 = vsub.f32 %v66, %v255
    %v257 = vand.u32 %v256, 4294901760
    %v258 = vsub.f32 %v256, %v257
    %v259 = vand.u32 %v258, 4294901760
    %260 = vmatpush1.msra.mxu0 %v259
    %261 = vmatprep.subr.mxu0 0.0
    %v262 = vand.u32 %v65, 4294901760
    %v263 = vsub.f32 %v65, %v262
    %v264 = vand.u32 %v263, 4294901760
    %v265 = vsub.f32 %v263, %v264
    %v266 = vand.u32 %v265, 4294901760
    %267 = vmatpush1.msra.mxu0 %v266
    %268 = vmatprep.subr.mxu0 0.0
    %v269 = vand.u32 %v64, 4294901760
    %v270 = vsub.f32 %v64, %v269
    %v271 = vand.u32 %v270, 4294901760
    %v272 = vsub.f32 %v270, %v271
    %v273 = vand.u32 %v272, 4294901760
    %274 = vmatpush1.msra.mxu0 %v273
    %275 = vmatprep.subr.mxu0 0.0
    %v276 = vand.u32 %v63, 4294901760
    %v277 = vsub.f32 %v63, %v276
    %v278 = vand.u32 %v277, 4294901760
    %v279 = vsub.f32 %v277, %v278
    %v280 = vand.u32 %v279, 4294901760
    %281 = vmatpush1.msra.mxu0 %v280
    %282 = vmatprep.subr.mxu0 0.0
    %283 = vmatpush2.msra.mxu0 0.0
    %284 = vmatprep.subr.mxu0 0.0
    %285 = vmatpush2.msra.mxu0 0.0
    %286 = vmatprep.subr.mxu0 0.0
    %287 = vmatpush2.msra.mxu0 0.0
    %288 = vmatprep.subr.mxu0 0.0
    %289 = vmatpush2.msra.mxu0 0.0
    %290 = vmatprep.subr.mxu0 0.0
    %291 = vmatpush2.msra.mxu0 0.0
    %292 = vmatprep.subr.mxu0 0.0
    %293 = vmatpush2.msra.mxu0 0.0
    %294 = vmatprep.subr.mxu0 0.0
    %295 = vmatpush2.msra.mxu0 0.0
    %296 = vmatprep.subr.mxu0 0.0
    %297 = vmatpush2.msra.mxu0 0.0
    %298 = vmatprep.subr.mxu0 0.0
    %299 = vmatpush2.msra.mxu0 0.0
    %300 = vmatprep.subr.mxu0 0.0
    %301 = vmatpush2.msra.mxu0 0.0
    %302 = vmatprep.subr.mxu0 0.0
    %303 = vmatpush2.msra.mxu0 0.0
    %304 = vmatprep.subr.mxu0 0.0
    %305 = vmatpush2.msra.mxu0 0.0
    %306 = vmatprep.subr.mxu0 0.0
    %307 = vmatpush2.msra.mxu0 0.0
    %308 = vmatprep.subr.mxu0 0.0
    %309 = vmatpush2.msra.mxu0 0.0
    %310 = vmatprep.subr.mxu0 0.0
    %311 = vmatpush2.msra.mxu0 0.0
    %312 = vmatprep.subr.mxu0 0.0
    %313 = vmatpush2.msra.mxu0 0.0
    %314 = vmatprep.mubr.f32.mxu0 0.0
    %v315 = vand.u32 %v62, 4294901760
    %316 = vmatmul.mubr.f32.gmra.mxu0 %v315
    %v317 = vpop.f32.mrf.mxu0
    %v318 = vadd.f32 %v167, %v317
    %v319 = vpop.f32.mrf.mxu0
    %320 = vdwg.mxu0
    %321 = vmatprep.subr.mxu0 0.0
    %v322 = vand.u32 %v78, 4294901760
    %v323 = vsub.f32 %v78, %v322
    %324 = vmatpush1.msra.mxu0 %v323
    %325 = vmatprep.subr.mxu0 0.0
    %v326 = vand.u32 %v77, 4294901760
    %v327 = vsub.f32 %v77, %v326
    %328 = vmatpush1.msra.mxu0 %v327
    %329 = vmatprep.subr.mxu0 0.0
    %v330 = vand.u32 %v76, 4294901760
    %v331 = vsub.f32 %v76, %v330
    %332 = vmatpush1.msra.mxu0 %v331
    %333 = vmatprep.subr.mxu0 0.0
    %v334 = vand.u32 %v75, 4294901760
    %v335 = vsub.f32 %v75, %v334
    %336 = vmatpush1.msra.mxu0 %v335
    %337 = vmatprep.subr.mxu0 0.0
    %v338 = vand.u32 %v74, 4294901760
    %v339 = vsub.f32 %v74, %v338
    %340 = vmatpush1.msra.mxu0 %v339
    %341 = vmatprep.subr.mxu0 0.0
    %v342 = vand.u32 %v73, 4294901760
    %v343 = vsub.f32 %v73, %v342
    %344 = vmatpush1.msra.mxu0 %v343
    %345 = vmatprep.subr.mxu0 0.0
    %v346 = vand.u32 %v72, 4294901760
    %v347 = vsub.f32 %v72, %v346
    %348 = vmatpush1.msra.mxu0 %v347
    %349 = vmatprep.subr.mxu0 0.0
    %v350 = vand.u32 %v71, 4294901760
    %v351 = vsub.f32 %v71, %v350
    %352 = vmatpush1.msra.mxu0 %v351
    %353 = vmatprep.subr.mxu0 0.0
    %v354 = vand.u32 %v70, 4294901760
    %v355 = vsub.f32 %v70, %v354
    %356 = vmatpush1.msra.mxu0 %v355
    %357 = vmatprep.subr.mxu0 0.0
    %v358 = vand.u32 %v69, 4294901760
    %v359 = vsub.f32 %v69, %v358
    %360 = vmatpush1.msra.mxu0 %v359
    %361 = vmatprep.subr.mxu0 0.0
    %v362 = vand.u32 %v68, 4294901760
    %v363 = vsub.f32 %v68, %v362
    %364 = vmatpush1.msra.mxu0 %v363
    %365 = vmatprep.subr.mxu0 0.0
    %v366 = vand.u32 %v67, 4294901760
    %v367 = vsub.f32 %v67, %v366
    %368 = vmatpush1.msra.mxu0 %v367
    %369 = vmatprep.subr.mxu0 0.0
    %v370 = vand.u32 %v66, 4294901760
    %v371 = vsub.f32 %v66, %v370
    %372 = vmatpush1.msra.mxu0 %v371
    %373 = vmatprep.subr.mxu0 0.0
    %v374 = vand.u32 %v65, 4294901760
    %v375 = vsub.f32 %v65, %v374
    %376 = vmatpush1.msra.mxu0 %v375
    %377 = vmatprep.subr.mxu0 0.0
    %v378 = vand.u32 %v64, 4294901760
    %v379 = vsub.f32 %v64, %v378
    %380 = vmatpush1.msra.mxu0 %v379
    %381 = vmatprep.subr.mxu0 0.0
    %v382 = vand.u32 %v63, 4294901760
    %v383 = vsub.f32 %v63, %v382
    %384 = vmatpush1.msra.mxu0 %v383
    %385 = vmatprep.subr.mxu0 0.0
    %386 = vmatpush2.msra.mxu0 0.0
    %387 = vmatprep.subr.mxu0 0.0
    %388 = vmatpush2.msra.mxu0 0.0
    %389 = vmatprep.subr.mxu0 0.0
    %390 = vmatpush2.msra.mxu0 0.0
    %391 = vmatprep.subr.mxu0 0.0
    %392 = vmatpush2.msra.mxu0 0.0
    %393 = vmatprep.subr.mxu0 0.0
    %394 = vmatpush2.msra.mxu0 0.0
    %395 = vmatprep.subr.mxu0 0.0
    %396 = vmatpush2.msra.mxu0 0.0
    %397 = vmatprep.subr.mxu0 0.0
    %398 = vmatpush2.msra.mxu0 0.0
    %399 = vmatprep.subr.mxu0 0.0
    %400 = vmatpush2.msra.mxu0 0.0
    %401 = vmatprep.subr.mxu0 0.0
    %402 = vmatpush2.msra.mxu0 0.0
    %403 = vmatprep.subr.mxu0 0.0
    %404 = vmatpush2.msra.mxu0 0.0
    %405 = vmatprep.subr.mxu0 0.0
    %406 = vmatpush2.msra.mxu0 0.0
    %407 = vmatprep.subr.mxu0 0.0
    %408 = vmatpush2.msra.mxu0 0.0
    %409 = vmatprep.subr.mxu0 0.0
    %410 = vmatpush2.msra.mxu0 0.0
    %411 = vmatprep.subr.mxu0 0.0
    %412 = vmatpush2.msra.mxu0 0.0
    %413 = vmatprep.subr.mxu0 0.0
    %414 = vmatpush2.msra.mxu0 0.0
    %415 = vmatprep.subr.mxu0 0.0
    %416 = vmatpush2.msra.mxu0 0.0
    %417 = vmatprep.mubr.f32.mxu0 0.0
    %v418 = vand.u32 %v62, 4294901760
    %v419 = vsub.f32 %v62, %v418
    %420 = vmatmul.mubr.f32.gmra.mxu0 %v419
    %v421 = vpop.f32.mrf.mxu0
    %v422 = vadd.f32 %v318, %v421
    %v423 = vpop.f32.mrf.mxu0
    %424 = vdwg.mxu0
    %425 = vmatprep.subr.mxu0 0.0
    %v426 = vand.u32 %v78, 4294901760
    %427 = vmatpush1.msra.mxu0 %v426
    %428 = vmatprep.subr.mxu0 0.0
    %v429 = vand.u32 %v77, 4294901760
    %430 = vmatpush1.msra.mxu0 %v429
    %431 = vmatprep.subr.mxu0 0.0
    %v432 = vand.u32 %v76, 4294901760
    %433 = vmatpush1.msra.mxu0 %v432
    %434 = vmatprep.subr.mxu0 0.0
    %v435 = vand.u32 %v75, 4294901760
    %436 = vmatpush1.msra.mxu0 %v435
    %437 = vmatprep.subr.mxu0 0.0
    %v438 = vand.u32 %v74, 4294901760
    %439 = vmatpush1.msra.mxu0 %v438
    %440 = vmatprep.subr.mxu0 0.0
    %v441 = vand.u32 %v73, 4294901760
    %442 = vmatpush1.msra.mxu0 %v441
    %443 = vmatprep.subr.mxu0 0.0
    %v444 = vand.u32 %v72, 4294901760
    %445 = vmatpush1.msra.mxu0 %v444
    %446 = vmatprep.subr.mxu0 0.0
    %v447 = vand.u32 %v71, 4294901760
    %448 = vmatpush1.msra.mxu0 %v447
    %449 = vmatprep.subr.mxu0 0.0
    %v450 = vand.u32 %v70, 4294901760
    %451 = vmatpush1.msra.mxu0 %v450
    %452 = vmatprep.subr.mxu0 0.0
    %v453 = vand.u32 %v69, 4294901760
    %454 = vmatpush1.msra.mxu0 %v453
    %455 = vmatprep.subr.mxu0 0.0
    %v456 = vand.u32 %v68, 4294901760
    %457 = vmatpush1.msra.mxu0 %v456
    %458 = vmatprep.subr.mxu0 0.0
    %v459 = vand.u32 %v67, 4294901760
    %460 = vmatpush1.msra.mxu0 %v459
    %461 = vmatprep.subr.mxu0 0.0
    %v462 = vand.u32 %v66, 4294901760
    %463 = vmatpush1.msra.mxu0 %v462
    %464 = vmatprep.subr.mxu0 0.0
    %v465 = vand.u32 %v65, 4294901760
    %466 = vmatpush1.msra.mxu0 %v465
    %467 = vmatprep.subr.mxu0 0.0
    %v468 = vand.u32 %v64, 4294901760
    %469 = vmatpush1.msra.mxu0 %v468
    %470 = vmatprep.subr.mxu0 0.0
    %v471 = vand.u32 %v63, 4294901760
    %472 = vmatpush1.msra.mxu0 %v471
    %473 = vmatprep.subr.mxu0 0.0
    %474 = vmatpush2.msra.mxu0 0.0
    %475 = vmatprep.subr.mxu0 0.0
    %476 = vmatpush2.msra.mxu0 0.0
    %477 = vmatprep.subr.mxu0 0.0
    %478 = vmatpush2.msra.mxu0 0.0
    %479 = vmatprep.subr.mxu0 0.0
    %480 = vmatpush2.msra.mxu0 0.0
    %481 = vmatprep.subr.mxu0 0.0
    %482 = vmatpush2.msra.mxu0 0.0
    %483 = vmatprep.subr.mxu0 0.0
    %484 = vmatpush2.msra.mxu0 0.0
    %485 = vmatprep.subr.mxu0 0.0
    %486 = vmatpush2.msra.mxu0 0.0
    %487 = vmatprep.subr.mxu0 0.0
    %488 = vmatpush2.msra.mxu0 0.0
    %489 = vmatprep.subr.mxu0 0.0
    %490 = vmatpush2.msra.mxu0 0.0
    %491 = vmatprep.subr.mxu0 0.0
    %492 = vmatpush2.msra.mxu0 0.0
    %493 = vmatprep.subr.mxu0 0.0
    %494 = vmatpush2.msra.mxu0 0.0
    %495 = vmatprep.subr.mxu0 0.0
    %496 = vmatpush2.msra.mxu0 0.0
    %497 = vmatprep.subr.mxu0 0.0
    %498 = vmatpush2.msra.mxu0 0.0
    %499 = vmatprep.subr.mxu0 0.0
    %500 = vmatpush2.msra.mxu0 0.0
    %501 = vmatprep.subr.mxu0 0.0
    %502 = vmatpush2.msra.mxu0 0.0
    %503 = vmatprep.subr.mxu0 0.0
    %504 = vmatpush2.msra.mxu0 0.0
    %505 = vmatprep.mubr.f32.mxu0 0.0
    %v506 = vand.u32 %v62, 4294901760
    %v507 = vsub.f32 %v62, %v506
    %v508 = vand.u32 %v507, 4294901760
    %509 = vmatmul.mubr.f32.gmra.mxu0 %v508
    %v510 = vpop.f32.mrf.mxu0
    %v511 = vadd.f32 %v422, %v510
    %v512 = vpop.f32.mrf.mxu0
    %513 = vdwg.mxu0
    %514 = vmatprep.subr.mxu0 0.0
    %v515 = vand.u32 %v78, 4294901760
    %v516 = vsub.f32 %v78, %v515
    %v517 = vand.u32 %v516, 4294901760
    %518 = vmatpush1.msra.mxu0 %v517
    %519 = vmatprep.subr.mxu0 0.0
    %v520 = vand.u32 %v77, 4294901760
    %v521 = vsub.f32 %v77, %v520
    %v522 = vand.u32 %v521, 4294901760
    %523 = vmatpush1.msra.mxu0 %v522
    %524 = vmatprep.subr.mxu0 0.0
    %v525 = vand.u32 %v76, 4294901760
    %v526 = vsub.f32 %v76, %v525
    %v527 = vand.u32 %v526, 4294901760
    %528 = vmatpush1.msra.mxu0 %v527
    %529 = vmatprep.subr.mxu0 0.0
    %v530 = vand.u32 %v75, 4294901760
    %v531 = vsub.f32 %v75, %v530
    %v532 = vand.u32 %v531, 4294901760
    %533 = vmatpush1.msra.mxu0 %v532
    %534 = vmatprep.subr.mxu0 0.0
    %v535 = vand.u32 %v74, 4294901760
    %v536 = vsub.f32 %v74, %v535
    %v537 = vand.u32 %v536, 4294901760
    %538 = vmatpush1.msra.mxu0 %v537
    %539 = vmatprep.subr.mxu0 0.0
    %v540 = vand.u32 %v73, 4294901760
    %v541 = vsub.f32 %v73, %v540
    %v542 = vand.u32 %v541, 4294901760
    %543 = vmatpush1.msra.mxu0 %v542
    %544 = vmatprep.subr.mxu0 0.0
    %v545 = vand.u32 %v72, 4294901760
    %v546 = vsub.f32 %v72, %v545
    %v547 = vand.u32 %v546, 4294901760
    %548 = vmatpush1.msra.mxu0 %v547
    %549 = vmatprep.subr.mxu0 0.0
    %v550 = vand.u32 %v71, 4294901760
    %v551 = vsub.f32 %v71, %v550
    %v552 = vand.u32 %v551, 4294901760
    %553 = vmatpush1.msra.mxu0 %v552
    %554 = vmatprep.subr.mxu0 0.0
    %v555 = vand.u32 %v70, 4294901760
    %v556 = vsub.f32 %v70, %v555
    %v557 = vand.u32 %v556, 4294901760
    %558 = vmatpush1.msra.mxu0 %v557
    %559 = vmatprep.subr.mxu0 0.0
    %v560 = vand.u32 %v69, 4294901760
    %v561 = vsub.f32 %v69, %v560
    %v562 = vand.u32 %v561, 4294901760
    %563 = vmatpush1.msra.mxu0 %v562
    %564 = vmatprep.subr.mxu0 0.0
    %v565 = vand.u32 %v68, 4294901760
    %v566 = vsub.f32 %v68, %v565
    %v567 = vand.u32 %v566, 4294901760
    %568 = vmatpush1.msra.mxu0 %v567
    %569 = vmatprep.subr.mxu0 0.0
    %v570 = vand.u32 %v67, 4294901760
    %v571 = vsub.f32 %v67, %v570
    %v572 = vand.u32 %v571, 4294901760
    %573 = vmatpush1.msra.mxu0 %v572
    %574 = vmatprep.subr.mxu0 0.0
    %v575 = vand.u32 %v66, 4294901760
    %v576 = vsub.f32 %v66, %v575
    %v577 = vand.u32 %v576, 4294901760
    %578 = vmatpush1.msra.mxu0 %v577
    %579 = vmatprep.subr.mxu0 0.0
    %v580 = vand.u32 %v65, 4294901760
    %v581 = vsub.f32 %v65, %v580
    %v582 = vand.u32 %v581, 4294901760
    %583 = vmatpush1.msra.mxu0 %v582
    %584 = vmatprep.subr.mxu0 0.0
    %v585 = vand.u32 %v64, 4294901760
    %v586 = vsub.f32 %v64, %v585
    %v587 = vand.u32 %v586, 4294901760
    %588 = vmatpush1.msra.mxu0 %v587
    %589 = vmatprep.subr.mxu0 0.0
    %v590 = vand.u32 %v63, 4294901760
    %v591 = vsub.f32 %v63, %v590
    %v592 = vand.u32 %v591, 4294901760
    %593 = vmatpush1.msra.mxu0 %v592
    %594 = vmatprep.subr.mxu0 0.0
    %595 = vmatpush2.msra.mxu0 0.0
    %596 = vmatprep.subr.mxu0 0.0
    %597 = vmatpush2.msra.mxu0 0.0
    %598 = vmatprep.subr.mxu0 0.0
    %599 = vmatpush2.msra.mxu0 0.0
    %600 = vmatprep.subr.mxu0 0.0
    %601 = vmatpush2.msra.mxu0 0.0
    %602 = vmatprep.subr.mxu0 0.0
    %603 = vmatpush2.msra.mxu0 0.0
    %604 = vmatprep.subr.mxu0 0.0
    %605 = vmatpush2.msra.mxu0 0.0
    %606 = vmatprep.subr.mxu0 0.0
    %607 = vmatpush2.msra.mxu0 0.0
    %608 = vmatprep.subr.mxu0 0.0
    %609 = vmatpush2.msra.mxu0 0.0
    %610 = vmatprep.subr.mxu0 0.0
    %611 = vmatpush2.msra.mxu0 0.0
    %612 = vmatprep.subr.mxu0 0.0
    %613 = vmatpush2.msra.mxu0 0.0
    %614 = vmatprep.subr.mxu0 0.0
    %615 = vmatpush2.msra.mxu0 0.0
    %616 = vmatprep.subr.mxu0 0.0
    %617 = vmatpush2.msra.mxu0 0.0
    %618 = vmatprep.subr.mxu0 0.0
    %619 = vmatpush2.msra.mxu0 0.0
    %620 = vmatprep.subr.mxu0 0.0
    %621 = vmatpush2.msra.mxu0 0.0
    %622 = vmatprep.subr.mxu0 0.0
    %623 = vmatpush2.msra.mxu0 0.0
    %624 = vmatprep.subr.mxu0 0.0
    %625 = vmatpush2.msra.mxu0 0.0
    %626 = vmatprep.mubr.f32.mxu0 0.0
    %v627 = vand.u32 %v62, 4294901760
    %628 = vmatmul.mubr.f32.gmra.mxu0 %v627
    %v629 = vpop.f32.mrf.mxu0
    %v630 = vadd.f32 %v511, %v629
    %v631 = vpop.f32.mrf.mxu0
    %632 = vdwg.mxu0
    %633 = vmatprep.subr.mxu0 0.0
    %v634 = vand.u32 %v78, 4294901760
    %635 = vmatpush1.msra.mxu0 %v634
    %636 = vmatprep.subr.mxu0 0.0
    %v637 = vand.u32 %v77, 4294901760
    %638 = vmatpush1.msra.mxu0 %v637
    %639 = vmatprep.subr.mxu0 0.0
    %v640 = vand.u32 %v76, 4294901760
    %641 = vmatpush1.msra.mxu0 %v640
    %642 = vmatprep.subr.mxu0 0.0
    %v643 = vand.u32 %v75, 4294901760
    %644 = vmatpush1.msra.mxu0 %v643
    %645 = vmatprep.subr.mxu0 0.0
    %v646 = vand.u32 %v74, 4294901760
    %647 = vmatpush1.msra.mxu0 %v646
    %648 = vmatprep.subr.mxu0 0.0
    %v649 = vand.u32 %v73, 4294901760
    %650 = vmatpush1.msra.mxu0 %v649
    %651 = vmatprep.subr.mxu0 0.0
    %v652 = vand.u32 %v72, 4294901760
    %653 = vmatpush1.msra.mxu0 %v652
    %654 = vmatprep.subr.mxu0 0.0
    %v655 = vand.u32 %v71, 4294901760
    %656 = vmatpush1.msra.mxu0 %v655
    %657 = vmatprep.subr.mxu0 0.0
    %v658 = vand.u32 %v70, 4294901760
    %659 = vmatpush1.msra.mxu0 %v658
    %660 = vmatprep.subr.mxu0 0.0
    %v661 = vand.u32 %v69, 4294901760
    %662 = vmatpush1.msra.mxu0 %v661
    %663 = vmatprep.subr.mxu0 0.0
    %v664 = vand.u32 %v68, 4294901760
    %665 = vmatpush1.msra.mxu0 %v664
    %666 = vmatprep.subr.mxu0 0.0
    %v667 = vand.u32 %v67, 4294901760
    %668 = vmatpush1.msra.mxu0 %v667
    %669 = vmatprep.subr.mxu0 0.0
    %v670 = vand.u32 %v66, 4294901760
    %671 = vmatpush1.msra.mxu0 %v670
    %672 = vmatprep.subr.mxu0 0.0
    %v673 = vand.u32 %v65, 4294901760
    %674 = vmatpush1.msra.mxu0 %v673
    %675 = vmatprep.subr.mxu0 0.0
    %v676 = vand.u32 %v64, 4294901760
    %677 = vmatpush1.msra.mxu0 %v676
    %678 = vmatprep.subr.mxu0 0.0
    %v679 = vand.u32 %v63, 4294901760
    %680 = vmatpush1.msra.mxu0 %v679
    %681 = vmatprep.subr.mxu0 0.0
    %682 = vmatpush2.msra.mxu0 0.0
    %683 = vmatprep.subr.mxu0 0.0
    %684 = vmatpush2.msra.mxu0 0.0
    %685 = vmatprep.subr.mxu0 0.0
    %686 = vmatpush2.msra.mxu0 0.0
    %687 = vmatprep.subr.mxu0 0.0
    %688 = vmatpush2.msra.mxu0 0.0
    %689 = vmatprep.subr.mxu0 0.0
    %690 = vmatpush2.msra.mxu0 0.0
    %691 = vmatprep.subr.mxu0 0.0
    %692 = vmatpush2.msra.mxu0 0.0
    %693 = vmatprep.subr.mxu0 0.0
    %694 = vmatpush2.msra.mxu0 0.0
    %695 = vmatprep.subr.mxu0 0.0
    %696 = vmatpush2.msra.mxu0 0.0
    %697 = vmatprep.subr.mxu0 0.0
    %698 = vmatpush2.msra.mxu0 0.0
    %699 = vmatprep.subr.mxu0 0.0
    %700 = vmatpush2.msra.mxu0 0.0
    %701 = vmatprep.subr.mxu0 0.0
    %702 = vmatpush2.msra.mxu0 0.0
    %703 = vmatprep.subr.mxu0 0.0
    %704 = vmatpush2.msra.mxu0 0.0
    %705 = vmatprep.subr.mxu0 0.0
    %706 = vmatpush2.msra.mxu0 0.0
    %707 = vmatprep.subr.mxu0 0.0
    %708 = vmatpush2.msra.mxu0 0.0
    %709 = vmatprep.subr.mxu0 0.0
    %710 = vmatpush2.msra.mxu0 0.0
    %711 = vmatprep.subr.mxu0 0.0
    %712 = vmatpush2.msra.mxu0 0.0
    %713 = vmatprep.mubr.f32.mxu0 0.0
    %v714 = vand.u32 %v62, 4294901760
    %715 = vmatmul.mubr.f32.gmra.mxu0 %v714
    %v716 = vpop.f32.mrf.mxu0
    %v717 = vadd.f32 %v630, %v716
    %v718 = vpop.f32.mrf.mxu0
    %719 = vdwg.mxu0
    %v720 = vrsqrt.pop %v717
    %v721 = vmul.f32 %v717, %v720
    %vm722 = vcmp.eq.f32.partialorder %v717, inf
    %v723 = vsel %vm722, %v717, %v721
    %vm724 = vcmp.eq.f32.partialorder %v717, 0.0
    %v725 = vand.u32 %v717, 2147483648
    %v726 = vsel %vm724, %v725, %v723
    %vm727 = vcmask 1040384
    %v728 = vsel %vm727, %v726, 0.0
    %729 = vadd.xlane.f32.xlu0 %v728
    %v730 = vpop.xlane.xlu0 %729
    %v731 = vrcp.pop 128.0
    %v732 = vmul.f32 %v730, %v731
    %v733 = vadd.f32 %v732, 1e-06
    %v734 = vrcp.pop %v733
    %v735 = vmul.f32 %v726, %v734
    %v736 = vld [vmem:[%s2] sm:$0x1]
    %v737 = vmul.f32 %v736, %v735
    %v738 = vadd.f32 %v737, 1.0
    %v740 = vlaneseq
    %v741 = vshrl.u32 %v740, 7
    %v742 = vsub.s32 0, %v741
    %v743 = vrot.slane %v738, %v742
    %v745 = vmul.f32 %v46, %v743
    %v746 = vmul.f32 %v47, %v743
    %v747 = vmul.f32 %v48, %v743
    %v748 = vmul.f32 %v49, %v743
    %v749 = vld [vmem:[%s3] sm:$0x1]
    %v751 = vlaneseq
    %v752 = vshrl.u32 %v751, 7
    %v753 = vsub.s32 0, %v752
    %v754 = vrot.slane %v749, %v753
    %v756 = vadd.f32 %v745, %v754
    %v757 = vadd.f32 %v746, %v754
    %v758 = vadd.f32 %v747, %v754
    %v759 = vadd.f32 %v748, %v754
    %760 = vst [vmem:[#allocation7] sm:$0xff] %v756
    %761 = vst [vmem:[#allocation7 + $0x8] sm:$0xff] %v757
    %762 = vst [vmem:[#allocation7 + $0x10] sm:$0xff] %v758
    %763 = vst [vmem:[#allocation7 + $0x18] sm:$0xff] %v759
    // Predicated region
    $region26: #{tpu_custom_call.1} parent=1 // pred_check
      _
    $region27: #{tpu_custom_call.1} parent=1 // pred_check_branch
      %765 = sbr.rel (0) target = $region29
    $region28: #{tpu_custom_call.1} parent=1 // pred_region
      %s767 = ssub.s32 512, 512
      %768 = vsyncadd [#allocation4], %s767
      %s769 = sshll.u32 [#allocation7], 4
      %s770 = int_to_ptr.vmem [resolvable:$true] %s769
      %775 = dma.vmem_to_hbm [thread:$0]  %s770, 512, %s4, [#allocation4], 128, 128, 8
    $region29: #{tpu_custom_call.1} parent=1 // pred_fallthru
      _
    // Predicated region
    $region30: #{tpu_custom_call.1} parent=1 // pred_check
      _
    $region31: #{tpu_custom_call.1} parent=1 // pred_check_branch
      %777 = sbr.rel (0) target = $region33
    $region32: #{tpu_custom_call.1} parent=1 // pred_region
      %778 = dma.done [#allocation4], 512
    $region33: #{tpu_custom_call.1} parent=1 // pred_fallthru
      _
    %779 = vsyncpa [#allocation3], 1
    %780 = vsyncpa [#allocation6], 1
    %781 = vsyncpa [#allocation4], 1

</llo_original>
